<compile_context>
chip_gen: v5e
topology: v5e:2x2
jax: 0.10.0
libtpu: 0.0.40
codegen_flags: <defaults>
</compile_context>

<pallas_src>
import functools

import jax
import jax.numpy as jnp
from jax.experimental import pallas as pl
from jax.experimental.pallas import tpu as pltpu


def policy_kernel(x_ref, w1_ref, b1_ref, w2_ref, b2_ref, o_ref):
    """One batch tile: softmax(relu(x @ W1 + b1) @ W2 + b2).

    x_ref:  [TB, S]  f32  (streamed per grid step, cast to bf16 in-register)
    w1_ref: [S, H]   bf16 (replicated)
    b1_ref: [1, H]   f32
    w2_ref: [H, A]   bf16 (replicated)
    b2_ref: [1, A]   f32
    o_ref:  [TB, A]  f32
    """
    # Linear1 (+bias) + ReLU: bf16 operands, f32 accumulation on the MXU.
    x = x_ref[...].astype(jnp.bfloat16)
    h = jnp.dot(x, w1_ref[...], preferred_element_type=jnp.float32)
    h = jnp.maximum(h + b1_ref[...], 0.0)

    # Linear2 (+bias): bf16 operands, f32 accumulation.
    logits = jnp.dot(h.astype(jnp.bfloat16), w2_ref[...],
                     preferred_element_type=jnp.float32) + b2_ref[...]

    # Numerically stable softmax over the action axis, all in f32.
    # Exact divide so each row sums to 1 within f32 rounding.
    m = jnp.max(logits, axis=-1, keepdims=True)
    e = jnp.exp(logits - m)
    denom = jnp.sum(e, axis=-1, keepdims=True)
    o_ref[...] = (e / denom).astype(o_ref.dtype)


def _round_up(v, m):
    return (v + m - 1) // m * m


def prepare_params(w1, b1, w2, b2):
    """One-time layout prep (hoisted out of the per-step forward).

    PyTorch nn.Linear layout: weight is [out, in]; pre-transpose to [in, out]
    so the kernel does plain x @ W, and cast weights to bf16 for the MXU.
    """
    w1_t = jnp.transpose(w1).astype(jnp.bfloat16)          # [S, H]
    w2_t = jnp.transpose(w2).astype(jnp.bfloat16)          # [H, A]
    b1_2d = b1.astype(jnp.float32).reshape(1, -1)          # [1, H]
    b2_2d = b2.astype(jnp.float32).reshape(1, -1)          # [1, A]
    return w1_t, b1_2d, w2_t, b2_2d


@functools.partial(jax.jit, static_argnames=("tb_max",))
def policy_forward(x, params, *, tb_max=2048):
    """PolicyNetwork forward.

    x:      [B, S] float32
    params: output of prepare_params(w1, b1, w2, b2)
    returns [B, A] float32 action probabilities.
    """
    w1_t, b1_2d, w2_t, b2_2d = params
    B, S = x.shape
    H = w1_t.shape[1]
    A = w2_t.shape[1]

    # Tile selection: bounded row padding; >= 2 grid steps for non-trivial B
    # so dimension_semantics=("parallel",) can shard across v7x's two TCs.
    num_tiles = pl.cdiv(B, tb_max)
    if B >= 32:
        num_tiles = max(num_tiles, 2)
    TB = _round_up(pl.cdiv(B, num_tiles), 16)   # packed bf16 sublanes
    B_pad = num_tiles * TB

    x_p = x if B_pad == B else jnp.pad(x, ((0, B_pad - B), (0, 0)))

    out = pl.pallas_call(
        policy_kernel,
        out_shape=jax.ShapeDtypeStruct((B_pad, A), jnp.float32),
        grid=(num_tiles,),
        in_specs=[
            pl.BlockSpec((TB, S), lambda i: (i, 0)),   # x: streamed per tile
            pl.BlockSpec((S, H), lambda i: (0, 0)),    # W1: replicated
            pl.BlockSpec((1, H), lambda i: (0, 0)),    # b1
            pl.BlockSpec((H, A), lambda i: (0, 0)),    # W2
            pl.BlockSpec((1, A), lambda i: (0, 0)),    # b2
        ],
        out_specs=pl.BlockSpec((TB, A), lambda i: (i, 0)),
        compiler_params=pltpu.CompilerParams(
            dimension_semantics=("parallel",)),        # megacore on v7x
    )(x_p, w1_t, b1_2d, w2_t, b2_2d)

    return out if B_pad == B else out[:B]


def _ref_forward(x, w1, b1, w2, b2):
    """Pure-JAX reference matching the kernel's bf16-operand / f32-acc matmuls."""
    xb = x.astype(jnp.bfloat16)
    w1b = jnp.transpose(w1).astype(jnp.bfloat16)
    h = jnp.dot(xb, w1b, preferred_element_type=jnp.float32) + b1.astype(jnp.float32)
    h = jnp.maximum(h, 0.0)
    w2b = jnp.transpose(w2).astype(jnp.bfloat16)
    logits = (jnp.dot(h.astype(jnp.bfloat16), w2b,
                      preferred_element_type=jnp.float32)
              + b2.astype(jnp.float32))
    return jax.nn.softmax(logits, axis=-1)


if __name__ == "__main__":
    # Small shapes consistent with the module: states=16, hidden=32, actions=8.
    batch, states, hidden, actions = 8, 16, 32, 8

    key = jax.random.PRNGKey(0)
    k_x, k_w1, k_b1, k_w2, k_b2 = jax.random.split(key, 5)

    x = jax.random.normal(k_x, (batch, states), dtype=jnp.float32)
    # PyTorch nn.Linear layout: weight is [out, in].
    w1 = jax.random.normal(k_w1, (hidden, states), dtype=jnp.float32) * 0.1
    b1 = jax.random.normal(k_b1, (hidden,), dtype=jnp.float32) * 0.1
    w2 = jax.random.normal(k_w2, (actions, hidden), dtype=jnp.float32) * 0.1
    b2 = jax.random.normal(k_b2, (actions,), dtype=jnp.float32) * 0.1

    params = prepare_params(w1, b1, w2, b2)   # one-time layout prep

    out = jax.block_until_ready(policy_forward(x, params))
    ref = _ref_forward(x, w1, b1, w2, b2)
    assert out.shape == (batch, actions)
    assert jnp.allclose(out, ref, atol=2e-3, rtol=2e-3)
    assert jnp.allclose(jnp.sum(out, axis=-1), 1.0, atol=1e-4)

    # Second run exercising a multi-tile grid and row padding (300 -> 3 x 112).
    x2 = jax.random.normal(jax.random.PRNGKey(1), (300, states), dtype=jnp.float32)
    out2 = jax.block_until_ready(policy_forward(x2, params, tb_max=128))
    ref2 = _ref_forward(x2, w1, b1, w2, b2)
    assert out2.shape == (300, actions)
    assert jnp.allclose(out2, ref2, atol=2e-3, rtol=2e-3)
    assert jnp.allclose(jnp.sum(out2, axis=-1), 1.0, atol=1e-4)

    print("KERNEL_OK")
</pallas_src>

<mosaic_0001>
module attributes {stable_mosaic.version = 11 : i64} {
  func.func @policy_kernel(%arg0: i32, %arg1: memref<16x16xf32, #tpu.memory_space<vmem>>, %arg2: memref<16x32xbf16, #tpu.memory_space<vmem>>, %arg3: memref<1x32xf32, #tpu.memory_space<vmem>>, %arg4: memref<32x8xbf16, #tpu.memory_space<vmem>>, %arg5: memref<1x8xf32, #tpu.memory_space<vmem>>, %arg6: memref<16x8xf32, #tpu.memory_space<vmem>>) attributes {dimension_semantics = [#tpu.dimension_semantics<parallel>], iteration_bounds = array<i64: 1>, scalar_prefetch = 0 : i64, scratch_operands = 0 : i64, tpu.core_type = #tpu.core_type<tc>, window_params = [{transform_indices = @transform_0, window_bounds = array<i64: 16, 16>}, {pipeline_mode = #tpu.pipeline_mode<synchronous>, transform_indices = @transform_1, window_bounds = array<i64: 16, 32>}, {pipeline_mode = #tpu.pipeline_mode<synchronous>, transform_indices = @transform_2, window_bounds = array<i64: 1, 32>}, {pipeline_mode = #tpu.pipeline_mode<synchronous>, transform_indices = @transform_3, window_bounds = array<i64: 32, 8>}, {pipeline_mode = #tpu.pipeline_mode<synchronous>, transform_indices = @transform_4, window_bounds = array<i64: 1, 8>}, {transform_indices = @transform_5, window_bounds = array<i64: 16, 8>}]} {
    %c0 = arith.constant 0 : index
    %c0_0 = arith.constant 0 : index
    %0 = vector.load %arg1[%c0, %c0_0] : memref<16x16xf32, #tpu.memory_space<vmem>>, vector<16x16xf32>
    %1 = arith.truncf %0 : vector<16x16xf32> to vector<16x16xbf16>
    %c0_1 = arith.constant 0 : index
    %c0_2 = arith.constant 0 : index
    %2 = vector.load %arg2[%c0_1, %c0_2] : memref<16x32xbf16, #tpu.memory_space<vmem>>, vector<16x32xbf16>
    %cst = arith.constant dense<0.000000e+00> : vector<16x32xf32>
    %3 = tpu.matmul %1, %2, %cst {dimension_numbers = #tpu.dot_dimension_numbers<[1], [0], [0], [1], [0, 0, 1, 1], [], []>} : vector<16x16xbf16>, vector<16x32xbf16>, vector<16x32xf32> -> vector<16x32xf32>
    %c0_3 = arith.constant 0 : index
    %c0_4 = arith.constant 0 : index
    %4 = vector.load %arg3[%c0_3, %c0_4] : memref<1x32xf32, #tpu.memory_space<vmem>>, vector<1x32xf32>
    %5 = vector.broadcast %4 : vector<1x32xf32> to vector<16x32xf32>
    %6 = arith.addf %3, %5 : vector<16x32xf32>
    %cst_5 = arith.constant 0.000000e+00 : f32
    %7 = vector.broadcast %cst_5 : f32 to vector<16x32xf32>
    %8 = arith.maximumf %6, %7 : vector<16x32xf32>
    %9 = arith.truncf %8 : vector<16x32xf32> to vector<16x32xbf16>
    %c0_6 = arith.constant 0 : index
    %c0_7 = arith.constant 0 : index
    %10 = vector.load %arg4[%c0_6, %c0_7] : memref<32x8xbf16, #tpu.memory_space<vmem>>, vector<32x8xbf16>
    %cst_8 = arith.constant dense<0.000000e+00> : vector<16x8xf32>
    %11 = tpu.matmul %9, %10, %cst_8 {dimension_numbers = #tpu.dot_dimension_numbers<[1], [0], [0], [1], [0, 0, 1, 1], [], []>} : vector<16x32xbf16>, vector<32x8xbf16>, vector<16x8xf32> -> vector<16x8xf32>
    %c0_9 = arith.constant 0 : index
    %c0_10 = arith.constant 0 : index
    %12 = vector.load %arg5[%c0_9, %c0_10] : memref<1x8xf32, #tpu.memory_space<vmem>>, vector<1x8xf32>
    %13 = vector.broadcast %12 : vector<1x8xf32> to vector<16x8xf32>
    %14 = arith.addf %11, %13 : vector<16x8xf32>
    %cst_11 = arith.constant dense<0xFF800000> : vector<16xf32>
    %15 = vector.multi_reduction <maximumf>, %14, %cst_11 [1] : vector<16x8xf32> to vector<16xf32>
    %16 = vector.shape_cast %15 : vector<16xf32> to vector<16x1xf32>
    %17 = vector.broadcast %16 : vector<16x1xf32> to vector<16x8xf32>
    %18 = arith.subf %14, %17 : vector<16x8xf32>
    %19 = math.exp %18 : vector<16x8xf32>
    %cst_12 = arith.constant dense<0.000000e+00> : vector<16xf32>
    %20 = vector.multi_reduction <add>, %19, %cst_12 [1] : vector<16x8xf32> to vector<16xf32>
    %21 = vector.shape_cast %20 : vector<16xf32> to vector<16x1xf32>
    %22 = vector.broadcast %21 : vector<16x1xf32> to vector<16x8xf32>
    %23 = arith.divf %19, %22 : vector<16x8xf32>
    %c0_13 = arith.constant 0 : index
    %c0_14 = arith.constant 0 : index
    %24 = vector.load %arg6[%c0_13, %c0_14] : memref<16x8xf32, #tpu.memory_space<vmem>>, vector<16x8xf32>
    tpu.vector_store %arg6[%c0_13, %c0_14], %23 {strides = array<i32>} : memref<16x8xf32, #tpu.memory_space<vmem>>, vector<16x8xf32>,
    return
  }
  func.func @transform_0(%arg0: i32) -> (i32, i32) {
    %c0_i32 = arith.constant 0 : i32
    %c0_i32_0 = arith.constant 0 : i32
    return %arg0, %c0_i32 : i32, i32
  }
  func.func @transform_1(%arg0: i32) -> (i32, i32) {
    %c0_i32 = arith.constant 0 : i32
    %c0_i32_0 = arith.constant 0 : i32
    %c0_i32_1 = arith.constant 0 : i32
    return %c0_i32, %c0_i32_0 : i32, i32
  }
  func.func @transform_2(%arg0: i32) -> (i32, i32) {
    %c0_i32 = arith.constant 0 : i32
    %c0_i32_0 = arith.constant 0 : i32
    %c0_i32_1 = arith.constant 0 : i32
    return %c0_i32, %c0_i32_0 : i32, i32
  }
  func.func @transform_3(%arg0: i32) -> (i32, i32) {
    %c0_i32 = arith.constant 0 : i32
    %c0_i32_0 = arith.constant 0 : i32
    %c0_i32_1 = arith.constant 0 : i32
    return %c0_i32, %c0_i32_0 : i32, i32
  }
  func.func @transform_4(%arg0: i32) -> (i32, i32) {
    %c0_i32 = arith.constant 0 : i32
    %c0_i32_0 = arith.constant 0 : i32
    %c0_i32_1 = arith.constant 0 : i32
    return %c0_i32, %c0_i32_0 : i32, i32
  }
  func.func @transform_5(%arg0: i32) -> (i32, i32) {
    %c0_i32 = arith.constant 0 : i32
    %c0_i32_0 = arith.constant 0 : i32
    return %arg0, %c0_i32 : i32, i32
  }
}

</mosaic_0001>

<llo_original>
// kernel: policy_forward.1
$region0: #{policy_forward.1}
  #allocation0 [shape = 'u32[]', space=smem, size = 0x4, offset = 0x4, fixed_abs, tag = 'smem constant byte address 0x4 - core index']
  #allocation1 [shape = 'u32[72,128]{1,0:T(1,128)}', space=vmem, size = 0x9000, scoped, tag = 'internal scratch']
  %s0 = inlined_call_operand.vmem [shape: f32[16,16], index: 0, kind: input, shape index: {}]
  %s1 = inlined_call_operand.vmem [shape: bf16[16,32], index: 1, kind: input, shape index: {}]
  %s2 = inlined_call_operand.vmem [shape: f32[1,32], index: 2, kind: input, shape index: {}]
  %s3 = inlined_call_operand.vmem [shape: bf16[32,8], index: 3, kind: input, shape index: {}]
  %s4 = inlined_call_operand.vmem [shape: f32[1,8], index: 4, kind: input, shape index: {}]
  %s5 = inlined_call_operand.vmem [shape: f32[16,8], index: 5, kind: output, shape index: {}]
  %s6 = sld [smem:[#allocation0]]
  $region30: #{policy_forward.1} parent=0
    _
  %s8 = ssub.s32 1, %s6
  %s9 = scalar_select 0, %s8, %s6
  // Predicated region
  $region2: #{policy_forward.1} parent=0 // pred_check
    _
  $region3: #{policy_forward.1} parent=0 // pred_check_branch
    %11 = sbr.rel (0) target = $region5
  $region4: #{policy_forward.1} parent=0 // pred_region
    _
  $region5: #{policy_forward.1} parent=0 // pred_fallthru
    _
  // Predicated region
  $region6: #{policy_forward.1} parent=0 // pred_check
    _
  $region7: #{policy_forward.1} parent=0 // pred_check_branch
    %13 = sbr.rel (0) target = $region9
  $region8: #{policy_forward.1} parent=0 // pred_region
    _
  $region9: #{policy_forward.1} parent=0 // pred_fallthru
    _
  // Predicated region
  $region10: #{policy_forward.1} parent=0 // pred_check
    _
  $region11: #{policy_forward.1} parent=0 // pred_check_branch
    %15 = sbr.rel (0) target = $region13
  $region12: #{policy_forward.1} parent=0 // pred_region
    _
  $region13: #{policy_forward.1} parent=0 // pred_fallthru
    _
  // Predicated region
  $region14: #{policy_forward.1} parent=0 // pred_check
    _
  $region15: #{policy_forward.1} parent=0 // pred_check_branch
    %17 = sbr.rel (0) target = $region17
  $region16: #{policy_forward.1} parent=0 // pred_region
    _
  $region17: #{policy_forward.1} parent=0 // pred_fallthru
    _
  // Predicated region
  $region18: #{policy_forward.1} parent=0 // pred_check
    _
  $region19: #{policy_forward.1} parent=0 // pred_check_branch
    %19 = sbr.rel (0) target = $region21
  $region20: #{policy_forward.1} parent=0 // pred_region
    _
  $region21: #{policy_forward.1} parent=0 // pred_fallthru
    _
  %v21 = vld [vmem:[%s0] sm:$0xff]
  %v22 = vld [vmem:[%s0 + $0x8] sm:$0xff]
  %v23 = vpack.c.bf16 %v22, %v21
  %v24 = vld [vmem:[%s1] sm:$0xf]
  %v25 = vld [vmem:[%s1 + $0x4] sm:$0xf]
  %v26 = vld [vmem:[%s2] sm:$0x1]
  %v28 = vperm.slane %v26, 0
  %v32 = vunpack.c.l.b16 %v24
  %v33 = vunpack.c.l.b16 %v25
  %v34 = vpack.c.b16 %v33, %v32
  %vm36 = vcmask 130048
  %v38 = vsel %vm36, %v23, 0
  %40 = vmatpush.bf16.msra.mxu0 0
  %41 = vmatpush.bf16.msra.mxu0 0
  %42 = vmatpush.bf16.msra.mxu0 0
  %43 = vmatpush.bf16.msra.mxu0 0
  %44 = vmatpush.bf16.msra.mxu0 0
  %45 = vmatpush.bf16.msra.mxu0 0
  %46 = vmatpush.bf16.msra.mxu0 0
  %47 = vmatpush.bf16.msra.mxu0 %v34
  %48 = vmatmul.bf16.gmra.mxu0 %v38
  %v49 = vpop.f32.mrf.mxu0
  %v50 = vadd.f32 %v28, %v49
  %v51 = vpop.f32.mrf.mxu0
  %v52 = vadd.f32 %v28, %v51
  %53 = vdwg.mxu0
  %v54 = vmax.f32 %v50, 0.0
  %v55 = vmax.f32 %v52, 0.0
  %v56 = vpack.c.bf16 %v55, %v54
  %v57 = vld [vmem:[%s3] sm:$0xf]
  %v58 = vld [vmem:[%s3 + $0x4] sm:$0xf]
  %v59 = vld [vmem:[%s3 + $0x8] sm:$0xf]
  %v60 = vld [vmem:[%s3 + $0xc] sm:$0xf]
  %v61 = vld [vmem:[%s4] sm:$0x1]
  %v63 = vperm.slane %v61, 0
  %v69 = vunpack.c.l.b16 %v57
  %v70 = vunpack.c.l.b16 %v58
  %v71 = vunpack.c.l.b16 %v59
  %v72 = vunpack.c.l.b16 %v60
  %v73 = vpack.c.b16 %v70, %v69
  %v74 = vpack.c.b16 %v72, %v71
  %vm77 = vcmask 261120
  %v79 = vsel %vm77, %v56, 0
  %81 = vmatpush.bf16.msra.mxu0 0
  %82 = vmatpush.bf16.msra.mxu0 0
  %83 = vmatpush.bf16.msra.mxu0 0
  %84 = vmatpush.bf16.msra.mxu0 0
  %85 = vmatpush.bf16.msra.mxu0 0
  %86 = vmatpush.bf16.msra.mxu0 0
  %87 = vmatpush.bf16.msra.mxu0 %v74
  %88 = vmatpush.bf16.msra.mxu0 %v73
  %89 = vmatmul.bf16.gmra.mxu0 %v79
  %v90 = vpop.f32.mrf.mxu0
  %v91 = vadd.f32 %v63, %v90
  %v92 = vpop.f32.mrf.mxu0
  %v93 = vadd.f32 %v63, %v92
  %94 = vdwg.mxu0
  %vm95 = vcmask 64512
  %v96 = vsel %vm95, %v91, -inf
  %97 = vmax.xlane.f32.xlu0 %v96
  %v98 = vpop.xlane.xlu0 %97
  %v99 = vsel %vm95, %v93, -inf
  %100 = vmax.xlane.f32.xlu0 %v99
  %v101 = vpop.xlane.xlu0 %100
  %v102 = vsub.f32 %v91, %v98
  %v103 = vsub.f32 %v93, %v101
  %v104 = vmul.f32 %v102, 1.442695
  %v105 = vpow.pop %v104
  %v106 = vmul.f32 %v103, 1.442695
  %v107 = vpow.pop %v106
  %v108 = vsel %vm95, %v105, 0.0
  %109 = vadd.xlane.f32.xlu0 %v108
  %v110 = vpop.xlane.xlu0 %109
  %v111 = vsel %vm95, %v107, 0.0
  %112 = vadd.xlane.f32.xlu0 %v111
  %v113 = vpop.xlane.xlu0 %112
  %v114 = vrcp.pop %v110
  %v115 = vmul.f32 %v110, %v114
  %v116 = vsub.f32 1.0, %v115
  %v117 = vmul.f32 %v114, %v116
  %v118 = vadd.f32 %v114, %v117
  %vm119 = vweird.f32 %v110
  %vm120 = vweird.f32 %v114
  %vm121 = vmor %vm119, %vm120
  %v122 = vsel %vm121, %v114, %v118
  %v123 = vand.u32 2147483647, %v110
  %vm124 = vcmp.eq.f32.partialorder %v123, 8.507059e+37
  %v125 = vand.u32 %v110, 2147483648
  %v126 = vor.u32 1.1754944e-38, %v125
  %v127 = vsel %vm124, %v126, %v122
  %v128 = vmul.f32 %v105, %v127
  %v129 = vrcp.pop %v113
  %v130 = vmul.f32 %v113, %v129
  %v131 = vsub.f32 1.0, %v130
  %v132 = vmul.f32 %v129, %v131
  %v133 = vadd.f32 %v129, %v132
  %vm134 = vweird.f32 %v113
  %vm135 = vweird.f32 %v129
  %vm136 = vmor %vm134, %vm135
  %v137 = vsel %vm136, %v129, %v133
  %v138 = vand.u32 2147483647, %v113
  %vm139 = vcmp.eq.f32.partialorder %v138, 8.507059e+37
  %v140 = vand.u32 %v113, 2147483648
  %v141 = vor.u32 1.1754944e-38, %v140
  %v142 = vsel %vm139, %v141, %v137
  %v143 = vmul.f32 %v107, %v142
  %144 = vst.msk [vmem:[%s5] sm:$0xff] %vm95, %v128
  %145 = vst.msk [vmem:[%s5 + $0x8] sm:$0xff] %vm95, %v143
  // Predicated region
  $region22: #{policy_forward.1} parent=0 // pred_check
    _
  $region23: #{policy_forward.1} parent=0 // pred_check_branch
    %147 = sbr.rel (0) target = $region25
  $region24: #{policy_forward.1} parent=0 // pred_region
    _
  $region25: #{policy_forward.1} parent=0 // pred_fallthru
    _
  // Predicated region
  $region26: #{policy_forward.1} parent=0 // pred_check
    _
  $region27: #{policy_forward.1} parent=0 // pred_check_branch
    %149 = sbr.rel (0) target = $region29
  $region28: #{policy_forward.1} parent=0 // pred_region
    _
  $region29: #{policy_forward.1} parent=0 // pred_fallthru
    _

</llo_original>
